<compile_context>
chip_gen: v7x
topology: tpu7x:2x2x1
jax: 0.10.0
libtpu: 0.0.40
codegen_flags: <defaults>
</compile_context>

<pallas_src>
import functools

import jax
import jax.numpy as jnp
from jax.experimental import pallas as pl
from jax.experimental.pallas import tpu as pltpu


def _round_up(x, m):
    return (x + m - 1) // m * m


def _choose_batch_tiling(B, tm_max):
    """Pick (tm_eff, B_pad): single block when possible, divisor-friendly tiles otherwise."""
    B8 = _round_up(B, 8)                      # sublane multiple
    if B8 <= tm_max:
        return B8, B8                         # one grid step
    best_tm, best_pad = None, None
    for cand in (1024, 512, 256, 128):
        if cand > tm_max:
            continue
        pad = _round_up(B8, cand)
        if best_pad is None or pad < best_pad or (pad == best_pad and cand > best_tm):
            best_tm, best_pad = cand, pad
    if best_tm is None:                       # tm_max < 128 (unusual)
        best_tm = _round_up(min(tm_max, B8), 8)
        best_pad = _round_up(B8, best_tm)
    return best_tm, best_pad


def dqn_kernel(x_ref, w1_ref, b1_ref, w2_ref, b2_ref, w3_ref, b3_ref, o_ref):
    n_actions = o_ref.shape[-1]
    # Layer 1: cast x to bf16 in-kernel (VPU, hides under MXU/DMA slack),
    # bf16 matmul on the MXU with f32 accumulation, f32 epilogue.
    x = x_ref[...].astype(jnp.bfloat16)
    h1 = jnp.dot(x, w1_ref[...], preferred_element_type=jnp.float32)
    h1 = jnp.maximum(h1 + b1_ref[...], 0.0)
    # Layer 2
    h2 = jnp.dot(h1.astype(jnp.bfloat16), w2_ref[...],
                 preferred_element_type=jnp.float32)
    h2 = jnp.maximum(h2 + b2_ref[...], 0.0)
    # Layer 3: matmul at lane-dense N_pad (w3 padded once at prepare time),
    # then statically slice the real action columns so only (tm, n_actions)
    # f32 ever leaves the kernel.
    out = jnp.dot(h2.astype(jnp.bfloat16), w3_ref[...],
                  preferred_element_type=jnp.float32)
    o_ref[...] = (out[:, :n_actions] + b3_ref[...]).astype(o_ref.dtype)


def prepare_params(params):
    """One-time prep: bf16 weights, f32 bias rows, w3 padded to a lane-dense width.

    Call once and reuse; do NOT call per forward (that was the biggest
    per-call overhead in the previous version).
    """
    n_obs, H = params["w1"].shape
    n_actions = params["w3"].shape[1]
    n_pad = _round_up(n_actions, 128)
    w3_p = jnp.zeros((H, n_pad), jnp.bfloat16).at[:, :n_actions].set(
        params["w3"].astype(jnp.bfloat16))
    return {
        "w1": params["w1"].astype(jnp.bfloat16),            # (n_obs, H)
        "b1": params["b1"].astype(jnp.float32).reshape(1, H),
        "w2": params["w2"].astype(jnp.bfloat16),             # (H, H)
        "b2": params["b2"].astype(jnp.float32).reshape(1, H),
        "w3": w3_p,                                           # (H, 128)
        "b3": params["b3"].astype(jnp.float32).reshape(1, n_actions),
    }


def dqn_forward(x, prep, *, tm_max=1024):
    """x: (B, n_obs) f32.  prep: output of prepare_params.  Returns (B, n_actions) f32."""
    B, n_obs = x.shape
    H = prep["w1"].shape[1]
    n_pad = prep["w3"].shape[1]
    n_actions = prep["b3"].shape[1]

    tm_eff, B_pad = _choose_batch_tiling(B, tm_max)
    grid = (B_pad // tm_eff,)

    x_in = x if B_pad == B else jnp.zeros((B_pad, n_obs), x.dtype).at[:B].set(x)

    flops = 2 * B_pad * (n_obs * H + H * H + H * n_pad)
    bytes_accessed = (B_pad * n_obs * 4                       # x (f32)
                      + (prep["w1"].size + prep["w2"].size + prep["w3"].size) * 2
                      + (prep["b1"].size + prep["b2"].size + prep["b3"].size) * 4
                      + B_pad * n_actions * 4)                # out (f32)

    out = pl.pallas_call(
        dqn_kernel,
        out_shape=jax.ShapeDtypeStruct((B_pad, n_actions), jnp.float32),
        grid=grid,
        in_specs=[
            pl.BlockSpec((tm_eff, n_obs), lambda i: (i, 0)),   # x   (streamed)
            pl.BlockSpec((n_obs, H), lambda i: (0, 0)),        # w1  (resident)
            pl.BlockSpec((1, H), lambda i: (0, 0)),            # b1
            pl.BlockSpec((H, H), lambda i: (0, 0)),            # w2
            pl.BlockSpec((1, H), lambda i: (0, 0)),            # b2
            pl.BlockSpec((H, n_pad), lambda i: (0, 0)),        # w3 (padded once)
            pl.BlockSpec((1, n_actions), lambda i: (0, 0)),    # b3
        ],
        out_specs=pl.BlockSpec((tm_eff, n_actions), lambda i: (i, 0)),
        compiler_params=pltpu.CompilerParams(
            dimension_semantics=("parallel",)),
        cost_estimate=pl.CostEstimate(
            flops=int(flops), transcendentals=0,
            bytes_accessed=int(bytes_accessed)),
    )(x_in, prep["w1"], prep["b1"], prep["w2"], prep["b2"], prep["w3"], prep["b3"])

    return out if B_pad == B else out[:B]


# Jitted entry point: fuses the batch pad of x and the final row slice with
# the pallas_call; callers should use this in the DQN loop.
dqn_apply = jax.jit(dqn_forward, static_argnames=("tm_max",))


def init_params(key, n_observations, n_actions, hidden=128):
    """PyTorch nn.Linear-style init: U(-1/sqrt(fan_in), 1/sqrt(fan_in))."""
    ks = jax.random.split(key, 6)

    def linear(kw, kb, fan_in, fan_out):
        bound = 1.0 / jnp.sqrt(jnp.float32(fan_in))
        w = jax.random.uniform(kw, (fan_in, fan_out), jnp.float32, -bound, bound)
        b = jax.random.uniform(kb, (1, fan_out), jnp.float32, -bound, bound)
        return w, b

    w1, b1 = linear(ks[0], ks[1], n_observations, hidden)
    w2, b2 = linear(ks[2], ks[3], hidden, hidden)
    w3, b3 = linear(ks[4], ks[5], hidden, n_actions)
    return {"w1": w1, "b1": b1, "w2": w2, "b2": b2, "w3": w3, "b3": b3}


def dqn_reference_f32(x, p):
    h1 = jnp.maximum(x @ p["w1"] + p["b1"], 0.0)
    h2 = jnp.maximum(h1 @ p["w2"] + p["b2"], 0.0)
    return h2 @ p["w3"] + p["b3"]


def dqn_reference_bf16(x, p):
    """Mirrors the kernel's bf16-operand / f32-accumulate numerics."""
    bf = lambda a: a.astype(jnp.bfloat16).astype(jnp.float32)
    h1 = jnp.maximum(bf(x) @ bf(p["w1"]) + p["b1"], 0.0)
    h2 = jnp.maximum(bf(h1) @ bf(p["w2"]) + p["b2"], 0.0)
    return bf(h2) @ bf(p["w3"]) + p["b3"]


if __name__ == "__main__":
    key = jax.random.PRNGKey(0)
    k_params, k_x = jax.random.split(key)

    # Small DQN shapes: flattened 8x8 gridworld observation, 4 actions.
    batch = 32
    n_observations = 64
    n_actions = 4
    hidden = 128

    params = init_params(k_params, n_observations, n_actions, hidden)
    prep = prepare_params(params)          # one-time weight prep (hoisted)
    x = jax.random.normal(k_x, (batch, n_observations), jnp.float32)

    out = jax.block_until_ready(dqn_apply(x, prep))
    assert out.shape == (batch, n_actions)
    # Tight check against a bf16-operand emulated reference ...
    assert jnp.allclose(out, dqn_reference_bf16(x, params), atol=1e-3, rtol=1e-3)
    # ... and a loose sanity check against the pure-f32 reference.
    assert jnp.allclose(out, dqn_reference_f32(x, params), atol=5e-2, rtol=5e-2)

    # Ragged batch (exercises the batch-pad / row-slice path).
    x_small = x[:5]
    out_small = jax.block_until_ready(dqn_apply(x_small, prep))
    assert out_small.shape == (5, n_actions)
    assert jnp.allclose(out_small, dqn_reference_bf16(x_small, params),
                        atol=1e-3, rtol=1e-3)

    print("KERNEL_OK")
</pallas_src>

<mosaic_0001>
module attributes {stable_mosaic.version = 11 : i64} {
  func.func @dqn_kernel(%arg0: i32, %arg1: memref<32x64xf32, #tpu.memory_space<vmem>>, %arg2: memref<64x128xbf16, #tpu.memory_space<vmem>>, %arg3: memref<1x128xf32, #tpu.memory_space<vmem>>, %arg4: memref<128x128xbf16, #tpu.memory_space<vmem>>, %arg5: memref<1x128xf32, #tpu.memory_space<vmem>>, %arg6: memref<128x128xbf16, #tpu.memory_space<vmem>>, %arg7: memref<1x4xf32, #tpu.memory_space<vmem>>, %arg8: memref<32x4xf32, #tpu.memory_space<vmem>>) attributes {dimension_semantics = [#tpu.dimension_semantics<parallel>], iteration_bounds = array<i64: 1>, scalar_prefetch = 0 : i64, scratch_operands = 0 : i64, tpu.core_type = #tpu.core_type<tc>, window_params = [{transform_indices = @transform_0, window_bounds = array<i64: 32, 64>}, {pipeline_mode = #tpu.pipeline_mode<synchronous>, transform_indices = @transform_1, window_bounds = array<i64: 64, 128>}, {pipeline_mode = #tpu.pipeline_mode<synchronous>, transform_indices = @transform_2, window_bounds = array<i64: 1, 128>}, {pipeline_mode = #tpu.pipeline_mode<synchronous>, transform_indices = @transform_3, window_bounds = array<i64: 128, 128>}, {pipeline_mode = #tpu.pipeline_mode<synchronous>, transform_indices = @transform_4, window_bounds = array<i64: 1, 128>}, {pipeline_mode = #tpu.pipeline_mode<synchronous>, transform_indices = @transform_5, window_bounds = array<i64: 128, 128>}, {pipeline_mode = #tpu.pipeline_mode<synchronous>, transform_indices = @transform_6, window_bounds = array<i64: 1, 4>}, {transform_indices = @transform_7, window_bounds = array<i64: 32, 4>}]} {
    %c0 = arith.constant 0 : index
    %c0_0 = arith.constant 0 : index
    %0 = vector.load %arg1[%c0, %c0_0] : memref<32x64xf32, #tpu.memory_space<vmem>>, vector<32x64xf32>
    %1 = arith.truncf %0 : vector<32x64xf32> to vector<32x64xbf16>
    %c0_1 = arith.constant 0 : index
    %c0_2 = arith.constant 0 : index
    %2 = vector.load %arg2[%c0_1, %c0_2] : memref<64x128xbf16, #tpu.memory_space<vmem>>, vector<64x128xbf16>
    %cst = arith.constant dense<0.000000e+00> : vector<32x128xf32>
    %3 = tpu.matmul %1, %2, %cst {dimension_numbers = #tpu.dot_dimension_numbers<[1], [0], [0], [1], [0, 0, 1, 1], [], []>} : vector<32x64xbf16>, vector<64x128xbf16>, vector<32x128xf32> -> vector<32x128xf32>
    %c0_3 = arith.constant 0 : index
    %c0_4 = arith.constant 0 : index
    %4 = vector.load %arg3[%c0_3, %c0_4] : memref<1x128xf32, #tpu.memory_space<vmem>>, vector<1x128xf32>
    %5 = vector.broadcast %4 : vector<1x128xf32> to vector<32x128xf32>
    %6 = arith.addf %3, %5 : vector<32x128xf32>
    %cst_5 = arith.constant 0.000000e+00 : f32
    %7 = vector.broadcast %cst_5 : f32 to vector<32x128xf32>
    %8 = arith.maximumf %6, %7 : vector<32x128xf32>
    %9 = arith.truncf %8 : vector<32x128xf32> to vector<32x128xbf16>
    %c0_6 = arith.constant 0 : index
    %c0_7 = arith.constant 0 : index
    %10 = vector.load %arg4[%c0_6, %c0_7] : memref<128x128xbf16, #tpu.memory_space<vmem>>, vector<128x128xbf16>
    %cst_8 = arith.constant dense<0.000000e+00> : vector<32x128xf32>
    %11 = tpu.matmul %9, %10, %cst_8 {dimension_numbers = #tpu.dot_dimension_numbers<[1], [0], [0], [1], [0, 0, 1, 1], [], []>} : vector<32x128xbf16>, vector<128x128xbf16>, vector<32x128xf32> -> vector<32x128xf32>
    %c0_9 = arith.constant 0 : index
    %c0_10 = arith.constant 0 : index
    %12 = vector.load %arg5[%c0_9, %c0_10] : memref<1x128xf32, #tpu.memory_space<vmem>>, vector<1x128xf32>
    %13 = vector.broadcast %12 : vector<1x128xf32> to vector<32x128xf32>
    %14 = arith.addf %11, %13 : vector<32x128xf32>
    %cst_11 = arith.constant 0.000000e+00 : f32
    %15 = vector.broadcast %cst_11 : f32 to vector<32x128xf32>
    %16 = arith.maximumf %14, %15 : vector<32x128xf32>
    %17 = arith.truncf %16 : vector<32x128xf32> to vector<32x128xbf16>
    %c0_12 = arith.constant 0 : index
    %c0_13 = arith.constant 0 : index
    %18 = vector.load %arg6[%c0_12, %c0_13] : memref<128x128xbf16, #tpu.memory_space<vmem>>, vector<128x128xbf16>
    %cst_14 = arith.constant dense<0.000000e+00> : vector<32x128xf32>
    %19 = tpu.matmul %17, %18, %cst_14 {dimension_numbers = #tpu.dot_dimension_numbers<[1], [0], [0], [1], [0, 0, 1, 1], [], []>} : vector<32x128xbf16>, vector<128x128xbf16>, vector<32x128xf32> -> vector<32x128xf32>
    %20 = vector.extract_strided_slice %19 {offsets = [0, 0], sizes = [32, 4], strides = [1, 1]} : vector<32x128xf32> to vector<32x4xf32>
    %c0_15 = arith.constant 0 : index
    %c0_16 = arith.constant 0 : index
    %21 = vector.load %arg7[%c0_15, %c0_16] : memref<1x4xf32, #tpu.memory_space<vmem>>, vector<1x4xf32>
    %22 = vector.broadcast %21 : vector<1x4xf32> to vector<32x4xf32>
    %23 = arith.addf %20, %22 : vector<32x4xf32>
    %c0_17 = arith.constant 0 : index
    %c0_18 = arith.constant 0 : index
    %24 = vector.load %arg8[%c0_17, %c0_18] : memref<32x4xf32, #tpu.memory_space<vmem>>, vector<32x4xf32>
    tpu.vector_store %arg8[%c0_17, %c0_18], %23 {strides = array<i32>} : memref<32x4xf32, #tpu.memory_space<vmem>>, vector<32x4xf32>,
    return
  }
  func.func @transform_0(%arg0: i32) -> (i32, i32) {
    %c0_i32 = arith.constant 0 : i32
    %c0_i32_0 = arith.constant 0 : i32
    return %arg0, %c0_i32 : i32, i32
  }
  func.func @transform_1(%arg0: i32) -> (i32, i32) {
    %c0_i32 = arith.constant 0 : i32
    %c0_i32_0 = arith.constant 0 : i32
    %c0_i32_1 = arith.constant 0 : i32
    return %c0_i32, %c0_i32_0 : i32, i32
  }
  func.func @transform_2(%arg0: i32) -> (i32, i32) {
    %c0_i32 = arith.constant 0 : i32
    %c0_i32_0 = arith.constant 0 : i32
    %c0_i32_1 = arith.constant 0 : i32
    return %c0_i32, %c0_i32_0 : i32, i32
  }
  func.func @transform_3(%arg0: i32) -> (i32, i32) {
    %c0_i32 = arith.constant 0 : i32
    %c0_i32_0 = arith.constant 0 : i32
    %c0_i32_1 = arith.constant 0 : i32
    return %c0_i32, %c0_i32_0 : i32, i32
  }
  func.func @transform_4(%arg0: i32) -> (i32, i32) {
    %c0_i32 = arith.constant 0 : i32
    %c0_i32_0 = arith.constant 0 : i32
    %c0_i32_1 = arith.constant 0 : i32
    return %c0_i32, %c0_i32_0 : i32, i32
  }
  func.func @transform_5(%arg0: i32) -> (i32, i32) {
    %c0_i32 = arith.constant 0 : i32
    %c0_i32_0 = arith.constant 0 : i32
    %c0_i32_1 = arith.constant 0 : i32
    return %c0_i32, %c0_i32_0 : i32, i32
  }
  func.func @transform_6(%arg0: i32) -> (i32, i32) {
    %c0_i32 = arith.constant 0 : i32
    %c0_i32_0 = arith.constant 0 : i32
    %c0_i32_1 = arith.constant 0 : i32
    return %c0_i32, %c0_i32_0 : i32, i32
  }
  func.func @transform_7(%arg0: i32) -> (i32, i32) {
    %c0_i32 = arith.constant 0 : i32
    %c0_i32_0 = arith.constant 0 : i32
    return %arg0, %c0_i32 : i32, i32
  }
}

</mosaic_0001>

<llo_original>
// kernel: dqn_forward.1
$region0: #{dqn_forward.1}
  #allocation0 [shape = 'u32[]', space=smem, size = 0x4, offset = 0x4, fixed_abs, tag = 'smem constant byte address 0x4 - core index']
  #allocation1 [shape = 'u32[144,128]{1,0:T(1,128)}', space=vmem, size = 0x12000, scoped, tag = 'internal scratch']
  %s0 = inlined_call_operand.hbm [shape: f32[32,64], index: 0, kind: input, shape index: {}]
  %s1 = inlined_call_operand.hbm [shape: bf16[64,128], index: 1, kind: input, shape index: {}]
  %s2 = inlined_call_operand.vmem [shape: f32[1,128], index: 2, kind: input, shape index: {}]
  %s3 = inlined_call_operand.hbm [shape: bf16[128,128], index: 3, kind: input, shape index: {}]
  %s4 = inlined_call_operand.vmem [shape: f32[1,128], index: 4, kind: input, shape index: {}]
  %s5 = inlined_call_operand.hbm [shape: bf16[128,128], index: 5, kind: input, shape index: {}]
  %s6 = inlined_call_operand.vmem [shape: f32[1,4], index: 6, kind: input, shape index: {}]
  %s7 = inlined_call_operand.vmem [shape: f32[32,4], index: 7, kind: output, shape index: {}]
  %s8 = sld [smem:[#allocation0]]
  $region54: #{dqn_forward.1} parent=0
    _
  %s10 = ssub.s32 1, %s8
  %s11 = scalar_select 0, %s10, %s8
  $region1: #{dqn_forward.1} parent=0
    #allocation2 [shape = 'u8[16384]{0}', space=vmem, size = 0x4000, scoped, tag = 'input window, operand 0, single buffered']
    #allocation3 [shape = 's32[1]{0}', space=sflag, size = 0x4, scoped, tag = 'scoped memory for dqn_forward.1']
    #allocation4 [shape = 'u8[16384]{0}', space=vmem, size = 0x4000, scoped, tag = 'input window, operand 1, single buffered']
    #allocation5 [shape = 's32[1]{0}', space=sflag, size = 0x4, scoped, tag = 'scoped memory for dqn_forward.1']
    #allocation6 [shape = 'u8[32768]{0}', space=vmem, size = 0x8000, scoped, tag = 'input window, operand 3, single buffered']
    #allocation7 [shape = 'u8[32768]{0}', space=vmem, size = 0x8000, scoped, tag = 'input window, operand 5, single buffered']
    #allocation8 [shape = 's32[1]{0}', space=sflag, size = 0x4, scoped, tag = 'scoped memory for dqn_forward.1']
    %12 = vsyncpa [#allocation3], 0
    %13 = vsyncpa [#allocation5], 0
    %14 = vsyncpa [#allocation8], 0
    // Predicated region
    $region2: #{dqn_forward.1} parent=1 // pred_check
      _
    $region3: #{dqn_forward.1} parent=1 // pred_check_branch
      %16 = sbr.rel (0) target = $region5
    $region4: #{dqn_forward.1} parent=1 // pred_region
      %s18 = ssub.s32 512, 512
      %19 = vsyncadd [#allocation3], %s18
      %s20 = sshll.u32 [#allocation2], 4
      %s21 = int_to_ptr.vmem [resolvable:$true] %s20
      %26 = dma.hbm_to_vmem [thread:$0]  %s0, 512, %s21, [#allocation3], 128, 128, 8
    $region5: #{dqn_forward.1} parent=1 // pred_fallthru
      _
    // Predicated region
    $region6: #{dqn_forward.1} parent=1 // pred_check
      _
    $region7: #{dqn_forward.1} parent=1 // pred_check_branch
      %28 = sbr.rel (0) target = $region9
    $region8: #{dqn_forward.1} parent=1 // pred_region
      %s30 = ssub.s32 512, 512
      %31 = vsyncadd [#allocation5], %s30
      %s32 = sshll.u32 [#allocation4], 4
      %s33 = int_to_ptr.vmem [resolvable:$true] %s32
      %38 = dma.hbm_to_vmem [thread:$0]  %s1, 512, %s33, [#allocation5], 64, 64, 4
    $region9: #{dqn_forward.1} parent=1 // pred_fallthru
      _
    // Predicated region
    $region10: #{dqn_forward.1} parent=1 // pred_check
      _
    $region11: #{dqn_forward.1} parent=1 // pred_check_branch
      %40 = sbr.rel (0) target = $region13
    $region12: #{dqn_forward.1} parent=1 // pred_region
      _
    $region13: #{dqn_forward.1} parent=1 // pred_fallthru
      _
    // Predicated region
    $region14: #{dqn_forward.1} parent=1 // pred_check
      _
    $region15: #{dqn_forward.1} parent=1 // pred_check_branch
      %42 = sbr.rel (0) target = $region17
    $region16: #{dqn_forward.1} parent=1 // pred_region
      %s44 = ssub.s32 1024, 1024
      %45 = vsyncadd [#allocation5], %s44
      %s46 = sshll.u32 [#allocation6], 4
      %s47 = int_to_ptr.vmem [resolvable:$true] %s46
      %52 = dma.hbm_to_vmem [thread:$0]  %s3, 1024, %s47, [#allocation5], 64, 64, 4
    $region17: #{dqn_forward.1} parent=1 // pred_fallthru
      _
    // Predicated region
    $region18: #{dqn_forward.1} parent=1 // pred_check
      _
    $region19: #{dqn_forward.1} parent=1 // pred_check_branch
      %54 = sbr.rel (0) target = $region21
    $region20: #{dqn_forward.1} parent=1 // pred_region
      _
    $region21: #{dqn_forward.1} parent=1 // pred_fallthru
      _
    // Predicated region
    $region22: #{dqn_forward.1} parent=1 // pred_check
      _
    $region23: #{dqn_forward.1} parent=1 // pred_check_branch
      %56 = sbr.rel (0) target = $region25
    $region24: #{dqn_forward.1} parent=1 // pred_region
      %s58 = ssub.s32 1024, 1024
      %59 = vsyncadd [#allocation8], %s58
      %s60 = sshll.u32 [#allocation7], 4
      %s61 = int_to_ptr.vmem [resolvable:$true] %s60
      %66 = dma.hbm_to_vmem [thread:$0]  %s5, 1024, %s61, [#allocation8], 64, 64, 4
    $region25: #{dqn_forward.1} parent=1 // pred_fallthru
      _
    // Predicated region
    $region26: #{dqn_forward.1} parent=1 // pred_check
      _
    $region27: #{dqn_forward.1} parent=1 // pred_check_branch
      %68 = sbr.rel (0) target = $region29
    $region28: #{dqn_forward.1} parent=1 // pred_region
      _
    $region29: #{dqn_forward.1} parent=1 // pred_fallthru
      _
    // Predicated region
    $region30: #{dqn_forward.1} parent=1 // pred_check
      _
    $region31: #{dqn_forward.1} parent=1 // pred_check_branch
      %70 = sbr.rel (0) target = $region33
    $region32: #{dqn_forward.1} parent=1 // pred_region
      %71 = dma.done [#allocation3], 512
    $region33: #{dqn_forward.1} parent=1 // pred_fallthru
      _
    // Predicated region
    $region34: #{dqn_forward.1} parent=1 // pred_check
      _
    $region35: #{dqn_forward.1} parent=1 // pred_check_branch
      %73 = sbr.rel (0) target = $region37
    $region36: #{dqn_forward.1} parent=1 // pred_region
      %74 = dma.done [#allocation5], 512
    $region37: #{dqn_forward.1} parent=1 // pred_fallthru
      _
    // Predicated region
    $region38: #{dqn_forward.1} parent=1 // pred_check
      _
    $region39: #{dqn_forward.1} parent=1 // pred_check_branch
      %76 = sbr.rel (0) target = $region41
    $region40: #{dqn_forward.1} parent=1 // pred_region
      %77 = dma.done [#allocation5], 1024
    $region41: #{dqn_forward.1} parent=1 // pred_fallthru
      _
    // Predicated region
    $region42: #{dqn_forward.1} parent=1 // pred_check
      _
    $region43: #{dqn_forward.1} parent=1 // pred_check_branch
      %79 = sbr.rel (0) target = $region45
    $region44: #{dqn_forward.1} parent=1 // pred_region
      %80 = dma.done [#allocation8], 1024
    $region45: #{dqn_forward.1} parent=1 // pred_fallthru
      _
    %v82 = vld [vmem:[#allocation2] sm:$0xff]
    %v83 = vld [vmem:[#allocation2 + $0x8] sm:$0xff]
    %v84 = vld [vmem:[#allocation2 + $0x10] sm:$0xff]
    %v85 = vld [vmem:[#allocation2 + $0x18] sm:$0xff]
    %v86 = vpack.c.bf16 %v83, %v82
    %v87 = vpack.c.bf16 %v85, %v84
    %v88 = vld [vmem:[#allocation4] sm:$0xf]
    %v89 = vld [vmem:[#allocation4 + $0x4] sm:$0xf]
    %v90 = vld [vmem:[#allocation4 + $0x8] sm:$0xf]
    %v91 = vld [vmem:[#allocation4 + $0xc] sm:$0xf]
    %v92 = vld [vmem:[#allocation4 + $0x10] sm:$0xf]
    %v93 = vld [vmem:[#allocation4 + $0x14] sm:$0xf]
    %v94 = vld [vmem:[#allocation4 + $0x18] sm:$0xf]
    %v95 = vld [vmem:[#allocation4 + $0x1c] sm:$0xf]
    %v96 = vld [vmem:[%s2] sm:$0x1]
    %v98 = vlaneseq
    %v99 = vshrl.u32 %v98, 7
    %v100 = vsub.s32 0, %v99
    %v101 = vrot.slane %v96, %v100
    %v111 = vunpack.c.l.b16 %v88
    %v112 = vunpack.c.l.b16 %v89
    %v113 = vunpack.c.l.b16 %v90
    %v114 = vunpack.c.l.b16 %v91
    %v115 = vunpack.c.l.b16 %v92
    %v116 = vunpack.c.l.b16 %v93
    %v117 = vunpack.c.l.b16 %v94
    %v118 = vunpack.c.l.b16 %v95
    %v119 = vpack.c.b16 %v112, %v111
    %v120 = vpack.c.b16 %v114, %v113
    %v121 = vpack.c.b16 %v116, %v115
    %v122 = vpack.c.b16 %v118, %v117
    %vm127 = vcmask 523264
    %v129 = vsel %vm127, %v86, 0
    %v132 = vsel %vm127, %v87, 0
    %134 = vmatprep.subr.bf16.mxu0 0
    %135 = vmatpush1.bf16.msra.mxu0 %v119
    %136 = vmatprep.subr.bf16.mxu0 0
    %137 = vmatpush1.bf16.msra.mxu0 %v120
    %138 = vmatprep.subr.bf16.mxu0 0
    %139 = vmatpush1.bf16.msra.mxu0 %v121
    %140 = vmatprep.subr.bf16.mxu0 0
    %141 = vmatpush1.bf16.msra.mxu0 %v122
    %142 = vmatprep.subr.bf16.mxu0 0
    %143 = vmatpush1.bf16.msra.mxu0 0
    %144 = vmatprep.subr.bf16.mxu0 0
    %145 = vmatpush1.bf16.msra.mxu0 0
    %146 = vmatprep.subr.bf16.mxu0 0
    %147 = vmatpush1.bf16.msra.mxu0 0
    %148 = vmatprep.subr.bf16.mxu0 0
    %149 = vmatpush1.bf16.msra.mxu0 0
    %150 = vmatprep.subr.bf16.mxu0 0
    %151 = vmatpush1.bf16.msra.mxu0 0
    %152 = vmatprep.subr.bf16.mxu0 0
    %153 = vmatpush1.bf16.msra.mxu0 0
    %154 = vmatprep.subr.bf16.mxu0 0
    %155 = vmatpush1.bf16.msra.mxu0 0
    %156 = vmatprep.subr.bf16.mxu0 0
    %157 = vmatpush1.bf16.msra.mxu0 0
    %158 = vmatprep.subr.bf16.mxu0 0
    %159 = vmatpush1.bf16.msra.mxu0 0
    %160 = vmatprep.subr.bf16.mxu0 0
    %161 = vmatpush1.bf16.msra.mxu0 0
    %162 = vmatprep.subr.bf16.mxu0 0
    %163 = vmatpush1.bf16.msra.mxu0 0
    %164 = vmatprep.subr.bf16.mxu0 0
    %165 = vmatpush1.bf16.msra.mxu0 0
    %166 = vmatprep.mubr.bf16.mxu0 0
    %167 = vmatmul.mubr.bf16.gmra.mrb[0].mxu0 %v129
    %v168 = vpop.f32.mrb[0].mxu0
    %v169 = vadd.f32 %v101, %v168
    %v170 = vpop.f32.mrb[0].mxu0
    %v171 = vpop.f32.mrb[0].mxu0
    %v172 = vadd.f32 %v101, %v171
    %v173 = vpop.f32.mrb[0].mxu0
    %174 = vmatprep.mubr.bf16.mxu0 0
    %175 = vmatmul.mubr.bf16.gmra.mrb[0].mxu0 %v132
    %v176 = vpop.f32.mrb[0].mxu0
    %v177 = vadd.f32 %v101, %v176
    %v178 = vpop.f32.mrb[0].mxu0
    %v179 = vpop.f32.mrb[0].mxu0
    %v180 = vadd.f32 %v101, %v179
    %v181 = vpop.f32.mrb[0].mxu0
    %182 = vdwg.mxu0
    %v183 = vmax.f32 %v169, 0.0
    %v184 = vmax.f32 %v172, 0.0
    %v185 = vmax.f32 %v177, 0.0
    %v186 = vmax.f32 %v180, 0.0
    %v187 = vpack.c.bf16 %v184, %v183
    %v188 = vpack.c.bf16 %v186, %v185
    %v189 = vld [vmem:[#allocation6] sm:$0xf]
    %v190 = vld [vmem:[#allocation6 + $0x4] sm:$0xf]
    %v191 = vld [vmem:[#allocation6 + $0x8] sm:$0xf]
    %v192 = vld [vmem:[#allocation6 + $0xc] sm:$0xf]
    %v193 = vld [vmem:[#allocation6 + $0x10] sm:$0xf]
    %v194 = vld [vmem:[#allocation6 + $0x14] sm:$0xf]
    %v195 = vld [vmem:[#allocation6 + $0x18] sm:$0xf]
    %v196 = vld [vmem:[#allocation6 + $0x1c] sm:$0xf]
    %v197 = vld [vmem:[#allocation6 + $0x20] sm:$0xf]
    %v198 = vld [vmem:[#allocation6 + $0x24] sm:$0xf]
    %v199 = vld [vmem:[#allocation6 + $0x28] sm:$0xf]
    %v200 = vld [vmem:[#allocation6 + $0x2c] sm:$0xf]
    %v201 = vld [vmem:[#allocation6 + $0x30] sm:$0xf]
    %v202 = vld [vmem:[#allocation6 + $0x34] sm:$0xf]
    %v203 = vld [vmem:[#allocation6 + $0x38] sm:$0xf]
    %v204 = vld [vmem:[#allocation6 + $0x3c] sm:$0xf]
    %v205 = vld [vmem:[%s4] sm:$0x1]
    %v207 = vlaneseq
    %v208 = vshrl.u32 %v207, 7
    %v209 = vsub.s32 0, %v208
    %v210 = vrot.slane %v205, %v209
    %v228 = vunpack.c.l.b16 %v189
    %v229 = vunpack.c.l.b16 %v190
    %v230 = vunpack.c.l.b16 %v191
    %v231 = vunpack.c.l.b16 %v192
    %v232 = vunpack.c.l.b16 %v193
    %v233 = vunpack.c.l.b16 %v194
    %v234 = vunpack.c.l.b16 %v195
    %v235 = vunpack.c.l.b16 %v196
    %v236 = vunpack.c.l.b16 %v197
    %v237 = vunpack.c.l.b16 %v198
    %v238 = vunpack.c.l.b16 %v199
    %v239 = vunpack.c.l.b16 %v200
    %v240 = vunpack.c.l.b16 %v201
    %v241 = vunpack.c.l.b16 %v202
    %v242 = vunpack.c.l.b16 %v203
    %v243 = vunpack.c.l.b16 %v204
    %v244 = vpack.c.b16 %v229, %v228
    %v245 = vpack.c.b16 %v231, %v230
    %v246 = vpack.c.b16 %v233, %v232
    %v247 = vpack.c.b16 %v235, %v234
    %v248 = vpack.c.b16 %v237, %v236
    %v249 = vpack.c.b16 %v239, %v238
    %v250 = vpack.c.b16 %v241, %v240
    %v251 = vpack.c.b16 %v243, %v242
    %260 = vmatprep.subr.bf16.mxu0 0
    %261 = vmatpush1.bf16.msra.mxu0 %v244
    %262 = vmatprep.subr.bf16.mxu0 0
    %263 = vmatpush1.bf16.msra.mxu0 %v245
    %264 = vmatprep.subr.bf16.mxu0 0
    %265 = vmatpush1.bf16.msra.mxu0 %v246
    %266 = vmatprep.subr.bf16.mxu0 0
    %267 = vmatpush1.bf16.msra.mxu0 %v247
    %268 = vmatprep.subr.bf16.mxu0 0
    %269 = vmatpush1.bf16.msra.mxu0 %v248
    %270 = vmatprep.subr.bf16.mxu0 0
    %271 = vmatpush1.bf16.msra.mxu0 %v249
    %272 = vmatprep.subr.bf16.mxu0 0
    %273 = vmatpush1.bf16.msra.mxu0 %v250
    %274 = vmatprep.subr.bf16.mxu0 0
    %275 = vmatpush1.bf16.msra.mxu0 %v251
    %276 = vmatprep.subr.bf16.mxu0 0
    %277 = vmatpush1.bf16.msra.mxu0 0
    %278 = vmatprep.subr.bf16.mxu0 0
    %279 = vmatpush1.bf16.msra.mxu0 0
    %280 = vmatprep.subr.bf16.mxu0 0
    %281 = vmatpush1.bf16.msra.mxu0 0
    %282 = vmatprep.subr.bf16.mxu0 0
    %283 = vmatpush1.bf16.msra.mxu0 0
    %284 = vmatprep.subr.bf16.mxu0 0
    %285 = vmatpush1.bf16.msra.mxu0 0
    %286 = vmatprep.subr.bf16.mxu0 0
    %287 = vmatpush1.bf16.msra.mxu0 0
    %288 = vmatprep.subr.bf16.mxu0 0
    %289 = vmatpush1.bf16.msra.mxu0 0
    %290 = vmatprep.subr.bf16.mxu0 0
    %291 = vmatpush1.bf16.msra.mxu0 0
    %292 = vmatprep.mubr.bf16.mxu0 0
    %293 = vmatmul.mubr.bf16.gmra.mrb[0].mxu0 %v187
    %v294 = vpop.f32.mrb[0].mxu0
    %v295 = vadd.f32 %v210, %v294
    %v296 = vpop.f32.mrb[0].mxu0
    %v297 = vpop.f32.mrb[0].mxu0
    %v298 = vadd.f32 %v210, %v297
    %v299 = vpop.f32.mrb[0].mxu0
    %300 = vmatprep.mubr.bf16.mxu0 0
    %301 = vmatmul.mubr.bf16.gmra.mrb[0].mxu0 %v188
    %v302 = vpop.f32.mrb[0].mxu0
    %v303 = vadd.f32 %v210, %v302
    %v304 = vpop.f32.mrb[0].mxu0
    %v305 = vpop.f32.mrb[0].mxu0
    %v306 = vadd.f32 %v210, %v305
    %v307 = vpop.f32.mrb[0].mxu0
    %308 = vdwg.mxu0
    %v309 = vmax.f32 %v295, 0.0
    %v310 = vmax.f32 %v298, 0.0
    %v311 = vmax.f32 %v303, 0.0
    %v312 = vmax.f32 %v306, 0.0
    %v313 = vpack.c.bf16 %v310, %v309
    %v314 = vpack.c.bf16 %v312, %v311
    %v315 = vld [vmem:[#allocation7] sm:$0xf]
    %v316 = vld [vmem:[#allocation7 + $0x4] sm:$0xf]
    %v317 = vld [vmem:[#allocation7 + $0x8] sm:$0xf]
    %v318 = vld [vmem:[#allocation7 + $0xc] sm:$0xf]
    %v319 = vld [vmem:[#allocation7 + $0x10] sm:$0xf]
    %v320 = vld [vmem:[#allocation7 + $0x14] sm:$0xf]
    %v321 = vld [vmem:[#allocation7 + $0x18] sm:$0xf]
    %v322 = vld [vmem:[#allocation7 + $0x1c] sm:$0xf]
    %v323 = vld [vmem:[#allocation7 + $0x20] sm:$0xf]
    %v324 = vld [vmem:[#allocation7 + $0x24] sm:$0xf]
    %v325 = vld [vmem:[#allocation7 + $0x28] sm:$0xf]
    %v326 = vld [vmem:[#allocation7 + $0x2c] sm:$0xf]
    %v327 = vld [vmem:[#allocation7 + $0x30] sm:$0xf]
    %v328 = vld [vmem:[#allocation7 + $0x34] sm:$0xf]
    %v329 = vld [vmem:[#allocation7 + $0x38] sm:$0xf]
    %v330 = vld [vmem:[#allocation7 + $0x3c] sm:$0xf]
    %v347 = vunpack.c.l.b16 %v315
    %v348 = vunpack.c.l.b16 %v316
    %v349 = vunpack.c.l.b16 %v317
    %v350 = vunpack.c.l.b16 %v318
    %v351 = vunpack.c.l.b16 %v319
    %v352 = vunpack.c.l.b16 %v320
    %v353 = vunpack.c.l.b16 %v321
    %v354 = vunpack.c.l.b16 %v322
    %v355 = vunpack.c.l.b16 %v323
    %v356 = vunpack.c.l.b16 %v324
    %v357 = vunpack.c.l.b16 %v325
    %v358 = vunpack.c.l.b16 %v326
    %v359 = vunpack.c.l.b16 %v327
    %v360 = vunpack.c.l.b16 %v328
    %v361 = vunpack.c.l.b16 %v329
    %v362 = vunpack.c.l.b16 %v330
    %v363 = vpack.c.b16 %v348, %v347
    %v364 = vpack.c.b16 %v350, %v349
    %v365 = vpack.c.b16 %v352, %v351
    %v366 = vpack.c.b16 %v354, %v353
    %v367 = vpack.c.b16 %v356, %v355
    %v368 = vpack.c.b16 %v358, %v357
    %v369 = vpack.c.b16 %v360, %v359
    %v370 = vpack.c.b16 %v362, %v361
    %379 = vmatprep.subr.bf16.mxu0 0
    %380 = vmatpush1.bf16.msra.mxu0 %v363
    %381 = vmatprep.subr.bf16.mxu0 0
    %382 = vmatpush1.bf16.msra.mxu0 %v364
    %383 = vmatprep.subr.bf16.mxu0 0
    %384 = vmatpush1.bf16.msra.mxu0 %v365
    %385 = vmatprep.subr.bf16.mxu0 0
    %386 = vmatpush1.bf16.msra.mxu0 %v366
    %387 = vmatprep.subr.bf16.mxu0 0
    %388 = vmatpush1.bf16.msra.mxu0 %v367
    %389 = vmatprep.subr.bf16.mxu0 0
    %390 = vmatpush1.bf16.msra.mxu0 %v368
    %391 = vmatprep.subr.bf16.mxu0 0
    %392 = vmatpush1.bf16.msra.mxu0 %v369
    %393 = vmatprep.subr.bf16.mxu0 0
    %394 = vmatpush1.bf16.msra.mxu0 %v370
    %395 = vmatprep.subr.bf16.mxu0 0
    %396 = vmatpush1.bf16.msra.mxu0 0
    %397 = vmatprep.subr.bf16.mxu0 0
    %398 = vmatpush1.bf16.msra.mxu0 0
    %399 = vmatprep.subr.bf16.mxu0 0
    %400 = vmatpush1.bf16.msra.mxu0 0
    %401 = vmatprep.subr.bf16.mxu0 0
    %402 = vmatpush1.bf16.msra.mxu0 0
    %403 = vmatprep.subr.bf16.mxu0 0
    %404 = vmatpush1.bf16.msra.mxu0 0
    %405 = vmatprep.subr.bf16.mxu0 0
    %406 = vmatpush1.bf16.msra.mxu0 0
    %407 = vmatprep.subr.bf16.mxu0 0
    %408 = vmatpush1.bf16.msra.mxu0 0
    %409 = vmatprep.subr.bf16.mxu0 0
    %410 = vmatpush1.bf16.msra.mxu0 0
    %411 = vmatprep.mubr.bf16.mxu0 0
    %412 = vmatmul.mubr.bf16.gmra.mrb[0].mxu0 %v313
    %v413 = vpop.f32.mrb[0].mxu0
    %v414 = vadd.f32 0.0, %v413
    %v415 = vpop.f32.mrb[0].mxu0
    %v416 = vpop.f32.mrb[0].mxu0
    %v417 = vadd.f32 0.0, %v416
    %v418 = vpop.f32.mrb[0].mxu0
    %419 = vmatprep.mubr.bf16.mxu0 0
    %420 = vmatmul.mubr.bf16.gmra.mrb[0].mxu0 %v314
    %v421 = vpop.f32.mrb[0].mxu0
    %v422 = vadd.f32 0.0, %v421
    %v423 = vpop.f32.mrb[0].mxu0
    %v424 = vpop.f32.mrb[0].mxu0
    %v425 = vadd.f32 0.0, %v424
    %v426 = vpop.f32.mrb[0].mxu0
    %427 = vdwg.mxu0
    %v428 = vld [vmem:[%s6] sm:$0x1]
    %v430 = vlaneseq
    %v431 = vshrl.u32 %v430, 7
    %v432 = vsub.s32 0, %v431
    %v433 = vrot.slane %v428, %v432
    %v435 = vadd.f32 %v414, %v433
    %v436 = vadd.f32 %v417, %v433
    %v437 = vadd.f32 %v422, %v433
    %v438 = vadd.f32 %v425, %v433
    %vm439 = vcmask 31744
    %440 = vst.msk [vmem:[%s7] sm:$0xff] %vm439, %v435
    %441 = vst.msk [vmem:[%s7 + $0x8] sm:$0xff] %vm439, %v436
    %442 = vst.msk [vmem:[%s7 + $0x10] sm:$0xff] %vm439, %v437
    %443 = vst.msk [vmem:[%s7 + $0x18] sm:$0xff] %vm439, %v438
    // Predicated region
    $region46: #{dqn_forward.1} parent=1 // pred_check
      _
    $region47: #{dqn_forward.1} parent=1 // pred_check_branch
      %445 = sbr.rel (0) target = $region49
    $region48: #{dqn_forward.1} parent=1 // pred_region
      _
    $region49: #{dqn_forward.1} parent=1 // pred_fallthru
      _
    // Predicated region
    $region50: #{dqn_forward.1} parent=1 // pred_check
      _
    $region51: #{dqn_forward.1} parent=1 // pred_check_branch
      %447 = sbr.rel (0) target = $region53
    $region52: #{dqn_forward.1} parent=1 // pred_region
      _
    $region53: #{dqn_forward.1} parent=1 // pred_fallthru
      _
    %448 = vsyncpa [#allocation3], 1
    %449 = vsyncpa [#allocation5], 1
    %450 = vsyncpa [#allocation8], 1

</llo_original>
